<compile_context>
chip_gen: v7x
topology: tpu7x:2x2x1
jax: 0.10.0
libtpu: 0.0.40
codegen_flags: <defaults>
</compile_context>

<pallas_src>
import math

import jax
import jax.numpy as jnp
from jax.experimental import pallas as pl
from jax.experimental.pallas import tpu as pltpu


_LANE_CANDIDATES = (1024, 512, 256, 128)   # lane-dense widths (multiples of 128)
_DEFAULT_BLOCK_BYTES = 4 * 1024 * 1024     # ~4 MiB per pipeline buffer


def _fusion_kernel(low_ref, high_ref, out_ref):
    # Always compute in f32 (EUP sigmoid + VPU mul/add); cast once at the store.
    low = low_ref[...].astype(jnp.float32)
    high = high_ref[...].astype(jnp.float32)
    out_ref[...] = (jax.nn.sigmoid(high) * low + high).astype(out_ref.dtype)


def _fused_2d(low2, high2, out_dtype, block_bytes):
    """Run the fusion kernel over a lane-dense (rows, lane) view."""
    rows, lane = low2.shape
    itemsize = max(jnp.dtype(low2.dtype).itemsize,
                   jnp.dtype(high2.dtype).itemsize,
                   jnp.dtype(out_dtype).itemsize)

    # Byte-budgeted block rows (~block_bytes per pipeline buffer), multiple of 8.
    target_rows = max(8, (block_bytes // (lane * itemsize)) // 8 * 8)

    # Prefer >= 2 grid steps so the double-buffered pipeline overlaps the next
    # read with the current compute/writeback and v7x has work for both TCs.
    if rows >= 16:
        target_rows = min(target_rows, max(8, ((rows + 1) // 2) // 8 * 8))

    if target_rows >= rows:
        # Single block covering the whole array (block == full dims satisfies
        # the (8, 128) rule regardless of `rows`).
        block_rows = rows
    else:
        # Prefer a multiple-of-8 divisor of `rows` near the byte target so the
        # grid divides exactly; otherwise fall back to a cdiv grid (Pallas
        # masks the partial boundary block).
        block_rows = None
        min_div = max(8, target_rows // 2)
        for cand in range(target_rows, min_div - 1, -8):
            if rows % cand == 0:
                block_rows = cand
                break
        if block_rows is None:
            block_rows = target_rows

    grid = (pl.cdiv(rows, block_rows),)
    spec = pl.BlockSpec((block_rows, lane), lambda i: (i, 0))

    # VMEM accounting: 3 arrays x 2 pipeline buffers x one block each.
    # <= ~24 MiB at the default 4 MiB budget; raise the scoped limit so this
    # also compiles on v5e (16 MiB default).  32 MiB stays well under v7x's
    # 64 MiB physical VMEM per TensorCore.
    block_elems = block_rows * lane
    vmem_needed = 2 * block_elems * (jnp.dtype(low2.dtype).itemsize
                                     + jnp.dtype(high2.dtype).itemsize
                                     + jnp.dtype(out_dtype).itemsize)
    vmem_limit = int(min(max(vmem_needed + (8 << 20), 32 << 20), 48 << 20))

    return pl.pallas_call(
        _fusion_kernel,
        out_shape=jax.ShapeDtypeStruct((rows, lane), out_dtype),
        grid=grid,
        in_specs=[spec, spec],
        out_specs=spec,
        compiler_params=pltpu.CompilerParams(
            # TODO(synk): verify in xprof that "parallel" shards this axis
            # across both v7x TensorCores; if only one TC is active, switch to
            # pltpu.CORE_PARALLEL (or an explicit leading core axis).
            dimension_semantics=("parallel",),
            vmem_limit_bytes=vmem_limit,
        ),
    )(low2, high2)


def _fused_xla(low, high, out_dtype):
    """Fused elementwise epilogue for small ragged tails (f32 compute)."""
    low32 = low.astype(jnp.float32)
    high32 = high.astype(jnp.float32)
    return (jax.nn.sigmoid(high32) * low32 + high32).astype(out_dtype)


def spatial_attention_fusion(low_level_features, high_level_features, *,
                             block_bytes=_DEFAULT_BLOCK_BYTES):
    """Pallas equivalent of SpatialAttentionFusionModule.forward.

    Returns sigmoid(high_level_features) * low_level_features + high_level_features.
    """
    assert low_level_features.shape == high_level_features.shape
    shape = low_level_features.shape
    out_dtype = jnp.result_type(low_level_features.dtype,
                                high_level_features.dtype)
    n = math.prod(shape)
    if n == 0:
        return jnp.zeros(shape, out_dtype)

    lane = next((c for c in _LANE_CANDIDATES if n % c == 0), None)

    if lane is not None:
        # Common case: zero-copy lane-dense reshape — no padding, no slicing.
        rows = n // lane
        out2 = _fused_2d(low_level_features.reshape(rows, lane),
                         high_level_features.reshape(rows, lane),
                         out_dtype, block_bytes)
        return out2.reshape(shape)

    # Ragged fallback (n not a multiple of 128): kernel on the divisible
    # prefix, fused XLA epilogue on the small tail.  Avoids full-array
    # jnp.pad of both inputs and the full-array output slice.
    lane = _LANE_CANDIDATES[0]
    chunk = lane * 8                       # prefix rows stay a multiple of 8
    n_main = (n // chunk) * chunk
    low_flat = low_level_features.reshape(-1)
    high_flat = high_level_features.reshape(-1)

    if n_main == 0:
        # Tensor smaller than one row-block: fused XLA only (too small for a
        # lane-dense Pallas launch to pay off).
        return _fused_xla(low_flat, high_flat, out_dtype).reshape(shape)

    rows = n_main // lane
    out_main = _fused_2d(low_flat[:n_main].reshape(rows, lane),
                         high_flat[:n_main].reshape(rows, lane),
                         out_dtype, block_bytes).reshape(-1)
    out_tail = _fused_xla(low_flat[n_main:], high_flat[n_main:], out_dtype)
    return jnp.concatenate([out_main, out_tail]).reshape(shape)


def _reference(low, high):
    return jax.nn.sigmoid(high) * low + high


if __name__ == "__main__":
    key = jax.random.PRNGKey(0)
    k_low, k_high = jax.random.split(key)

    # Primary shape implied by the module: small conv feature maps.
    B, C, H, W = 2, 4, 16, 16
    low = jax.random.normal(k_low, (B, C, H, W), dtype=jnp.float32)
    high = jax.random.normal(k_high, (B, C, H, W), dtype=jnp.float32)
    out = spatial_attention_fusion(low, high)
    jax.block_until_ready(out)
    assert out.shape == (B, C, H, W)
    assert jnp.allclose(out, _reference(low, high), atol=1e-5, rtol=1e-5)

    # Lane-divisible shape large enough to exercise the multi-block pipeline.
    B2, C2, H2, W2 = 2, 8, 64, 64
    low2 = jax.random.normal(k_low, (B2, C2, H2, W2), dtype=jnp.float32)
    high2 = jax.random.normal(k_high, (B2, C2, H2, W2), dtype=jnp.float32)
    out2 = spatial_attention_fusion(low2, high2)
    jax.block_until_ready(out2)
    assert jnp.allclose(out2, _reference(low2, high2), atol=1e-5, rtol=1e-5)

    # Ragged element count (not a multiple of 128): prefix kernel + XLA tail.
    B3, C3, H3, W3 = 3, 5, 33, 47
    low3 = jax.random.normal(k_low, (B3, C3, H3, W3), dtype=jnp.float32)
    high3 = jax.random.normal(k_high, (B3, C3, H3, W3), dtype=jnp.float32)
    out3 = spatial_attention_fusion(low3, high3)
    jax.block_until_ready(out3)
    assert jnp.allclose(out3, _reference(low3, high3), atol=1e-5, rtol=1e-5)

    # bf16 inputs: kernel computes in f32 and casts once at the store.
    lowb = low2.astype(jnp.bfloat16)
    highb = high2.astype(jnp.bfloat16)
    outb = spatial_attention_fusion(lowb, highb)
    jax.block_until_ready(outb)
    refb = _reference(lowb.astype(jnp.float32),
                      highb.astype(jnp.float32)).astype(jnp.bfloat16)
    assert outb.dtype == jnp.bfloat16
    assert jnp.allclose(outb.astype(jnp.float32), refb.astype(jnp.float32),
                        atol=1e-2, rtol=1e-2)

    print("KERNEL_OK")
</pallas_src>

<mosaic_0001>
module attributes {stable_mosaic.version = 11 : i64} {
  func.func @_fusion_kernel(%arg0: i32, %arg1: memref<2x1024xf32, #tpu.memory_space<vmem>>, %arg2: memref<2x1024xf32, #tpu.memory_space<vmem>>, %arg3: memref<2x1024xf32, #tpu.memory_space<vmem>>) attributes {dimension_semantics = [#tpu.dimension_semantics<parallel>], iteration_bounds = array<i64: 1>, scalar_prefetch = 0 : i64, scratch_operands = 0 : i64, tpu.core_type = #tpu.core_type<tc>, window_params = [{transform_indices = @transform_0, window_bounds = array<i64: 2, 1024>}, {transform_indices = @transform_1, window_bounds = array<i64: 2, 1024>}, {transform_indices = @transform_2, window_bounds = array<i64: 2, 1024>}]} {
    %c0 = arith.constant 0 : index
    %c0_0 = arith.constant 0 : index
    %0 = vector.load %arg1[%c0, %c0_0] : memref<2x1024xf32, #tpu.memory_space<vmem>>, vector<2x1024xf32>
    %c0_1 = arith.constant 0 : index
    %c0_2 = arith.constant 0 : index
    %1 = vector.load %arg2[%c0_1, %c0_2] : memref<2x1024xf32, #tpu.memory_space<vmem>>, vector<2x1024xf32>
    %2 = arith.negf %1 : vector<2x1024xf32>
    %3 = math.exp %2 : vector<2x1024xf32>
    %cst = arith.constant 1.000000e+00 : f32
    %4 = vector.broadcast %cst : f32 to vector<2x1024xf32>
    %5 = arith.addf %4, %3 : vector<2x1024xf32>
    %6 = arith.divf %4, %5 : vector<2x1024xf32>
    %7 = arith.mulf %6, %0 : vector<2x1024xf32>
    %8 = arith.addf %7, %1 : vector<2x1024xf32>
    %c0_3 = arith.constant 0 : index
    %c0_4 = arith.constant 0 : index
    %9 = vector.load %arg3[%c0_3, %c0_4] : memref<2x1024xf32, #tpu.memory_space<vmem>>, vector<2x1024xf32>
    tpu.vector_store %arg3[%c0_3, %c0_4], %8 {strides = array<i32>} : memref<2x1024xf32, #tpu.memory_space<vmem>>, vector<2x1024xf32>,
    return
  }
  func.func @transform_0(%arg0: i32) -> (i32, i32) {
    %c0_i32 = arith.constant 0 : i32
    %c0_i32_0 = arith.constant 0 : i32
    return %arg0, %c0_i32 : i32, i32
  }
  func.func @transform_1(%arg0: i32) -> (i32, i32) {
    %c0_i32 = arith.constant 0 : i32
    %c0_i32_0 = arith.constant 0 : i32
    return %arg0, %c0_i32 : i32, i32
  }
  func.func @transform_2(%arg0: i32) -> (i32, i32) {
    %c0_i32 = arith.constant 0 : i32
    %c0_i32_0 = arith.constant 0 : i32
    return %arg0, %c0_i32 : i32, i32
  }
}

</mosaic_0001>

<llo_original>
// kernel: tpu_custom_call.1
$region0: #{tpu_custom_call.1}
  #allocation0 [shape = 'u32[]', space=smem, size = 0x4, offset = 0x4, fixed_abs, tag = 'smem constant byte address 0x4 - core index']
  #allocation1 [shape = 'u32[144,128]{1,0:T(1,128)}', space=vmem, size = 0x12000, scoped, tag = 'internal scratch']
  %s0 = inlined_call_operand.hbm [shape: f32[2,1024], index: 0, kind: input, shape index: {}]
  %s1 = inlined_call_operand.hbm [shape: f32[2,1024], index: 1, kind: input, shape index: {}]
  %s2 = inlined_call_operand.hbm [shape: f32[2,1024], index: 2, kind: output, shape index: {}]
  %s3 = sld [smem:[#allocation0]]
  $region26: #{tpu_custom_call.1} parent=0
    _
  %s5 = ssub.s32 1, %s3
  %s6 = scalar_select 0, %s5, %s3
  $region1: #{tpu_custom_call.1} parent=0
    #allocation2 [shape = 'u8[8192]{0}', space=vmem, size = 0x2000, scoped, tag = 'input window, operand 0, single buffered']
    #allocation3 [shape = 's32[1]{0}', space=sflag, size = 0x4, scoped, tag = 'scoped memory for tpu_custom_call.1']
    #allocation4 [shape = 's32[1]{0}', space=sflag, size = 0x4, scoped, tag = 'scoped memory for tpu_custom_call.1']
    #allocation5 [shape = 'u8[8192]{0}', space=vmem, size = 0x2000, scoped, tag = 'input window, operand 1, single buffered']
    #allocation6 [shape = 's32[1]{0}', space=sflag, size = 0x4, scoped, tag = 'scoped memory for tpu_custom_call.1']
    #allocation7 [shape = 'u8[8192]{0}', space=vmem, size = 0x2000, scoped, tag = 'output window, operand 0, single buffered']
    %7 = vsyncpa [#allocation3], 0
    %8 = vsyncpa [#allocation6], 0
    %9 = vsyncpa [#allocation4], 0
    // Predicated region
    $region2: #{tpu_custom_call.1} parent=1 // pred_check
      _
    $region3: #{tpu_custom_call.1} parent=1 // pred_check_branch
      %11 = sbr.rel (0) target = $region5
    $region4: #{tpu_custom_call.1} parent=1 // pred_region
      %s13 = ssub.s32 256, 256
      %14 = vsyncadd [#allocation3], %s13
      %s16 = sshll.u32 [#allocation2], 4
      %s17 = int_to_ptr.vmem [resolvable:$true] %s16
      %19 = dma.hbm_to_vmem [thread:$0]  %s0, 256, %s17, [#allocation3]
    $region5: #{tpu_custom_call.1} parent=1 // pred_fallthru
      _
    // Predicated region
    $region6: #{tpu_custom_call.1} parent=1 // pred_check
      _
    $region7: #{tpu_custom_call.1} parent=1 // pred_check_branch
      %21 = sbr.rel (0) target = $region9
    $region8: #{tpu_custom_call.1} parent=1 // pred_region
      %s23 = ssub.s32 256, 256
      %24 = vsyncadd [#allocation6], %s23
      %s26 = sshll.u32 [#allocation5], 4
      %s27 = int_to_ptr.vmem [resolvable:$true] %s26
      %29 = dma.hbm_to_vmem [thread:$0]  %s1, 256, %s27, [#allocation6]
    $region9: #{tpu_custom_call.1} parent=1 // pred_fallthru
      _
    // Predicated region
    $region10: #{tpu_custom_call.1} parent=1 // pred_check
      _
    $region11: #{tpu_custom_call.1} parent=1 // pred_check_branch
      %31 = sbr.rel (0) target = $region13
    $region12: #{tpu_custom_call.1} parent=1 // pred_region
      %32 = dma.done [#allocation3], 256
    $region13: #{tpu_custom_call.1} parent=1 // pred_fallthru
      _
    // Predicated region
    $region14: #{tpu_custom_call.1} parent=1 // pred_check
      _
    $region15: #{tpu_custom_call.1} parent=1 // pred_check_branch
      %34 = sbr.rel (0) target = $region17
    $region16: #{tpu_custom_call.1} parent=1 // pred_region
      %35 = dma.done [#allocation6], 256
    $region17: #{tpu_custom_call.1} parent=1 // pred_fallthru
      _
    %v36 = vld [vmem:[#allocation2] sm:$0xff]
    %v37 = vld [vmem:[#allocation2 + $0x8] sm:$0xff]
    %v38 = vld [vmem:[#allocation5] sm:$0xff]
    %v39 = vld [vmem:[#allocation5 + $0x8] sm:$0xff]
    %v40 = vxor.u32 %v38, 2147483648
    %v41 = vxor.u32 %v39, 2147483648
    %v42 = vmul.f32 %v40, 1.442695
    %v43 = vpow.pop %v42
    %v44 = vmul.f32 %v41, 1.442695
    %v45 = vpow.pop %v44
    %v46 = vadd.f32 %v43, 1.0
    %v47 = vadd.f32 %v45, 1.0
    %v48 = vrcp.pop %v46
    %v49 = vmul.f32 1.0, %v48
    %v50 = vrcp.pop %v47
    %v51 = vmul.f32 1.0, %v50
    %v52 = vmul.f32 %v49, %v36
    %v53 = vmul.f32 %v51, %v37
    %v54 = vadd.f32 %v52, %v38
    %v55 = vadd.f32 %v53, %v39
    %56 = vst [vmem:[#allocation7] sm:$0xff] %v54
    %57 = vst [vmem:[#allocation7 + $0x8] sm:$0xff] %v55
    // Predicated region
    $region18: #{tpu_custom_call.1} parent=1 // pred_check
      _
    $region19: #{tpu_custom_call.1} parent=1 // pred_check_branch
      %59 = sbr.rel (0) target = $region21
    $region20: #{tpu_custom_call.1} parent=1 // pred_region
      %s61 = ssub.s32 256, 256
      %62 = vsyncadd [#allocation4], %s61
      %s64 = sshll.u32 [#allocation7], 4
      %s65 = int_to_ptr.vmem [resolvable:$true] %s64
      %67 = dma.vmem_to_hbm [thread:$0]  %s65, 256, %s2, [#allocation4]
    $region21: #{tpu_custom_call.1} parent=1 // pred_fallthru
      _
    // Predicated region
    $region22: #{tpu_custom_call.1} parent=1 // pred_check
      _
    $region23: #{tpu_custom_call.1} parent=1 // pred_check_branch
      %69 = sbr.rel (0) target = $region25
    $region24: #{tpu_custom_call.1} parent=1 // pred_region
      %70 = dma.done [#allocation4], 256
    $region25: #{tpu_custom_call.1} parent=1 // pred_fallthru
      _
    %71 = vsyncpa [#allocation3], 1
    %72 = vsyncpa [#allocation6], 1
    %73 = vsyncpa [#allocation4], 1

</llo_original>
